<compile_context>
chip_gen: v7x
topology: tpu7x:2x2x1
jax: 0.10.0
libtpu: 0.0.40
codegen_flags: <defaults>
</compile_context>

<pallas_src>
import functools

import jax
import jax.numpy as jnp
from jax.experimental import pallas as pl
from jax.experimental.pallas import tpu as pltpu


def _resblock2_kernel(x_ref, wrow_ref, bias_ref, scale_ref, shift_ref,
                      out_ref, yp_ref, *, dilation, H, Bt):
    """One block of Bt images per grid step.

    x_ref:     (Bt, H, Lp)      lane-dense, lane-padded f32 input block
    wrow_ref:  (3, Lp, Lp)      row-lowered conv weights, bf16 (pad rows/cols 0)
    bias_ref:  (1, Lp)          conv bias tiled across W (pad lanes 0), f32
    scale_ref: (1, Lp)          gamma / sqrt(var+eps) tiled across W, f32
    shift_ref: (1, Lp)          beta - mean*scale tiled across W, f32
    out_ref:   (Bt, H, Lp)      f32 output block
    yp_ref:    (Bt, H+2d, Lp)   bf16 scratch: relu(bn(x)) with d-row zero halos
    """
    d = dilation
    Lp = x_ref.shape[-1]
    M = Bt * H

    x = x_ref[...]                                           # (Bt, H, Lp) f32

    # Fused BatchNorm (folded per-channel affine) + ReLU, in f32.
    y = jnp.maximum(x * scale_ref[...] + shift_ref[...], 0.0)

    # Padded activation scratch (bf16 for the MXU).  Only the 2*d halo rows per
    # image are zeroed (cheap; interior rows are fully overwritten each step,
    # which is safe under "parallel" grid semantics).  Width padding is folded
    # into the lowered weights, so no lane-concatenate is needed here.
    zrow = jnp.zeros((Bt, d, Lp), yp_ref.dtype)
    yp_ref[:, 0:d, :] = zrow
    yp_ref[:, H + d:H + 2 * d, :] = zrow
    yp_ref[:, d:d + H, :] = y.astype(yp_ref.dtype)

    # 3x3 dilated conv as 3 MXU matmuls with M = Bt*H, K = Lp, N = Lp.
    # Each lhs is a contiguous sublane band of the scratch at full lane width.
    # TODO(synk): for very large M, merging the 3 dots into one K=3*Lp matmul
    # (stacked bands) would fill the 256-deep MXU K dim better on v6e/v7x.
    def band(kh):
        return yp_ref[:, kh * d:kh * d + H, :].reshape(M, Lp)

    acc = jnp.dot(band(0), wrow_ref[0], preferred_element_type=jnp.float32)
    acc = acc + jnp.dot(band(1), wrow_ref[1],
                        preferred_element_type=jnp.float32)
    acc = acc + jnp.dot(band(2), wrow_ref[2],
                        preferred_element_type=jnp.float32)

    # Residual add + conv bias (f32).  Padded lanes stay exactly zero.
    out_ref[...] = x + acc.reshape(Bt, H, Lp) + bias_ref[...]


def _row_lowered_weights(w_oihw, W, dilation, Lp, dtype=jnp.bfloat16):
    """Build (3, Lp, Lp) matrices so that, for kernel row kh, ONE matmul over an
    (unpadded-width) activation row band computes every (kw, ci, w) tap of the
    3x3 dilated conv.  Width zero-padding is folded in by simply dropping
    out-of-range taps:

        wrow[kh, iw*Cin + ci, w*Cout + co] = w[co, ci, kh, kw]
        with iw = w + (kw - 1)*dilation, kept only when 0 <= iw < W.

    Rows >= W*Cin and columns >= W*Cout are zero (lane padding to Lp).
    """
    # TODO(synk): this lowered weight is O(W^2 * Cin * Cout); for large W tile
    # the W axis (extra grid dim) and single-buffer the weight operand so it
    # fits v7x's 64 MiB VMEM.
    Cout, Cin, KH, KW = w_oihw.shape
    d = dilation
    w_hwio = jnp.transpose(w_oihw.astype(jnp.float32), (2, 3, 1, 0))  # (3,3,Ci,Co)

    r_idx = jnp.arange(W * Cin)
    q_idx = jnp.arange(W * Cout)
    r_w, r_ci = r_idx // Cin, r_idx % Cin
    q_w, q_co = q_idx // Cout, q_idx % Cout
    diff = r_w[:, None] - q_w[None, :]                       # (W*Cin, W*Cout)

    mats = []
    for kh in range(KH):
        m = jnp.zeros((W * Cin, W * Cout), jnp.float32)
        for kw in range(KW):
            vals = w_hwio[kh, kw][r_ci[:, None], q_co[None, :]]
            m = m + jnp.where(diff == (kw - 1) * d, vals, 0.0)
        mats.append(m)
    wrow = jnp.stack(mats)                                   # (3, W*Cin, W*Cout)
    wrow = jnp.pad(wrow, ((0, 0), (0, Lp - W * Cin), (0, Lp - W * Cout)))
    return wrow.astype(dtype)


def _pick_block_batch(N, H):
    """Images per grid step: target M = Bt*H ~ 256 MXU rows, but keep the grid
    length >= 2 (v7x has two TensorCores) and Bt a divisor of N."""
    bt = max(1, min(N, 256 // max(H, 1)))
    while bt > 1 and (N % bt != 0 or N // bt < 2):
        bt -= 1
    return bt


def residual_block2(x_nchw, w_oihw, bias, gamma, beta, *, dilation, eps=1e-5):
    """Pallas implementation of ResidualBlock2.forward (NCHW in / NCHW out)."""
    x_nchw = x_nchw.astype(jnp.float32)
    N, C, H, W = x_nchw.shape
    Cout = w_oihw.shape[0]
    assert Cout == C, "residual add requires in_channels == out_channels"
    d = dilation
    WC = W * C
    Lp = ((WC + 127) // 128) * 128            # lane-padded minor dim (mult of 128)

    # Lane-dense layout: NHWC flattened to (N, H, W*C).  BN batch statistics are
    # reduced from this same tensor so XLA fuses the transpose and both
    # reductions into a single HBM read of x.
    # TODO(synk): when chaining blocks, keep activations in this (N, H, W*C)
    # layout between pallas_calls instead of round-tripping NCHW each time.
    x_lane = jnp.transpose(x_nchw, (0, 2, 3, 1)).reshape(N, H, WC)

    cnt = N * H * W
    s1 = jnp.sum(x_lane, axis=(0, 1)).reshape(W, C).sum(axis=0)
    s2 = jnp.sum(x_lane * x_lane, axis=(0, 1)).reshape(W, C).sum(axis=0)
    mean = s1 / cnt
    # TODO(synk): single-pass E[x^2]-E[x]^2 is cancellation-prone when
    # |mean| >> std; use a two-pass / Welford form for real activations.
    var = jnp.maximum(s2 / cnt - mean * mean, 0.0)
    scale = gamma.astype(jnp.float32) * jax.lax.rsqrt(var + eps)
    shift = beta.astype(jnp.float32) - mean * scale

    # Zero-pad the lane dim to Lp (padded lanes stay exactly zero end to end).
    x_pad = jnp.pad(x_lane, ((0, 0), (0, 0), (0, Lp - WC)))
    scale_t = jnp.pad(jnp.tile(scale, W), (0, Lp - WC)).reshape(1, Lp)
    shift_t = jnp.pad(jnp.tile(shift, W), (0, Lp - WC)).reshape(1, Lp)
    bias_t = jnp.pad(jnp.tile(bias.astype(jnp.float32), W),
                     (0, Lp - W * Cout)).reshape(1, Lp)

    wrow = _row_lowered_weights(w_oihw, W, d, Lp)            # (3, Lp, Lp) bf16

    Bt = _pick_block_batch(N, H)
    grid = (N // Bt,)

    kernel = functools.partial(_resblock2_kernel, dilation=d, H=H, Bt=Bt)

    out = pl.pallas_call(
        kernel,
        out_shape=jax.ShapeDtypeStruct((N, H, Lp), jnp.float32),
        grid=grid,
        in_specs=[
            pl.BlockSpec((Bt, H, Lp), lambda n: (n, 0, 0)),
            pl.BlockSpec((3, Lp, Lp), lambda n: (0, 0, 0)),   # grid-invariant
            pl.BlockSpec((1, Lp), lambda n: (0, 0)),
            pl.BlockSpec((1, Lp), lambda n: (0, 0)),
            pl.BlockSpec((1, Lp), lambda n: (0, 0)),
        ],
        out_specs=pl.BlockSpec((Bt, H, Lp), lambda n: (n, 0, 0)),
        scratch_shapes=[
            pltpu.VMEM((Bt, H + 2 * d, Lp), jnp.bfloat16),
        ],
        compiler_params=pltpu.CompilerParams(
            dimension_semantics=("parallel",),
            vmem_limit_bytes=32 * 1024 * 1024,
        ),
    )(x_pad, wrow, bias_t, scale_t, shift_t)

    # TODO(synk): for large H also tile the H axis with a d-row halo (manual
    # DMA of the overlapping rows) instead of a whole image per grid step.

    out = out[..., :WC].reshape(N, H, W, Cout)
    return jnp.transpose(out, (0, 3, 1, 2))                  # back to NCHW


def _reference(x_nchw, w_oihw, bias, gamma, beta, *, dilation, eps=1e-5):
    """Pure-JAX f32 reference matching PyTorch forward semantics."""
    x = x_nchw.astype(jnp.float32)
    mean = jnp.mean(x, axis=(0, 2, 3), keepdims=True)
    var = jnp.mean((x - mean) ** 2, axis=(0, 2, 3), keepdims=True)
    y = (x - mean) / jnp.sqrt(var + eps)
    y = y * gamma.reshape(1, -1, 1, 1) + beta.reshape(1, -1, 1, 1)
    y = jnp.maximum(y, 0.0)
    conv = jax.lax.conv_general_dilated(
        y, w_oihw.astype(jnp.float32), window_strides=(1, 1),
        padding=((dilation, dilation), (dilation, dilation)),
        rhs_dilation=(dilation, dilation),
        dimension_numbers=("NCHW", "OIHW", "NCHW"))
    conv = conv + bias.reshape(1, -1, 1, 1)
    return x + conv


if __name__ == "__main__":
    # ResidualBlock2 requires in_channels == out_channels for the residual add.
    # N=4 exercises the Bt=2 image-blocking path while keeping grid length 2.
    N, C, H, W = 4, 4, 16, 16
    dilation = 2

    key = jax.random.PRNGKey(0)
    kx, kw, kb, kg, kbt = jax.random.split(key, 5)

    x = jax.random.normal(kx, (N, C, H, W), dtype=jnp.float32)
    # Deterministic synthetic parameters (module __init__ shapes).
    w_oihw = 0.1 * jax.random.normal(kw, (C, C, 3, 3), dtype=jnp.float32)  # conv1.weight
    bias = 0.1 * jax.random.normal(kb, (C,), dtype=jnp.float32)            # conv1.bias
    gamma = 1.0 + 0.1 * jax.random.normal(kg, (C,), dtype=jnp.float32)     # bn1.weight
    beta = 0.1 * jax.random.normal(kbt, (C,), dtype=jnp.float32)           # bn1.bias

    fn = jax.jit(residual_block2, static_argnames=("dilation", "eps"))
    out = fn(x, w_oihw, bias, gamma, beta, dilation=dilation)
    out = jax.block_until_ready(out)

    ref = _reference(x, w_oihw, bias, gamma, beta, dilation=dilation)
    assert out.shape == (N, C, H, W)
    err = jnp.max(jnp.abs(out - ref))
    # bf16 MXU operands (f32 accumulation) -> loosened tolerance vs f32 reference.
    assert jnp.allclose(out, ref, rtol=5e-2, atol=5e-2), f"max abs err = {err}"

    print("KERNEL_OK")
</pallas_src>

<mosaic_0001>
module attributes {stable_mosaic.version = 11 : i64} {
  func.func @_resblock2_kernel(%arg0: i32, %arg1: memref<2x16x128xf32, #tpu.memory_space<vmem>>, %arg2: memref<3x128x128xbf16, #tpu.memory_space<vmem>>, %arg3: memref<1x128xf32, #tpu.memory_space<vmem>>, %arg4: memref<1x128xf32, #tpu.memory_space<vmem>>, %arg5: memref<1x128xf32, #tpu.memory_space<vmem>>, %arg6: memref<2x16x128xf32, #tpu.memory_space<vmem>>, %arg7: memref<2x20x128xbf16, #tpu.memory_space<vmem>>) attributes {dimension_semantics = [#tpu.dimension_semantics<parallel>], iteration_bounds = array<i64: 2>, scalar_prefetch = 0 : i64, scratch_operands = 1 : i64, tpu.core_type = #tpu.core_type<tc>, window_params = [{transform_indices = @transform_0, window_bounds = array<i64: 2, 16, 128>}, {pipeline_mode = #tpu.pipeline_mode<synchronous>, transform_indices = @transform_1, window_bounds = array<i64: 3, 128, 128>}, {pipeline_mode = #tpu.pipeline_mode<synchronous>, transform_indices = @transform_2, window_bounds = array<i64: 1, 128>}, {pipeline_mode = #tpu.pipeline_mode<synchronous>, transform_indices = @transform_3, window_bounds = array<i64: 1, 128>}, {pipeline_mode = #tpu.pipeline_mode<synchronous>, transform_indices = @transform_4, window_bounds = array<i64: 1, 128>}, {transform_indices = @transform_5, window_bounds = array<i64: 2, 16, 128>}]} {
    %c0 = arith.constant 0 : index
    %c0_0 = arith.constant 0 : index
    %c0_1 = arith.constant 0 : index
    %0 = vector.load %arg1[%c0, %c0_0, %c0_1] : memref<2x16x128xf32, #tpu.memory_space<vmem>>, vector<2x16x128xf32>
    %c0_2 = arith.constant 0 : index
    %c0_3 = arith.constant 0 : index
    %1 = vector.load %arg4[%c0_2, %c0_3] : memref<1x128xf32, #tpu.memory_space<vmem>>, vector<1x128xf32>
    %2 = vector.shape_cast %1 : vector<1x128xf32> to vector<1x1x128xf32>
    %3 = vector.broadcast %2 : vector<1x1x128xf32> to vector<2x16x128xf32>
    %4 = arith.mulf %0, %3 : vector<2x16x128xf32>
    %c0_4 = arith.constant 0 : index
    %c0_5 = arith.constant 0 : index
    %5 = vector.load %arg5[%c0_4, %c0_5] : memref<1x128xf32, #tpu.memory_space<vmem>>, vector<1x128xf32>
    %6 = vector.shape_cast %5 : vector<1x128xf32> to vector<1x1x128xf32>
    %7 = vector.broadcast %6 : vector<1x1x128xf32> to vector<2x16x128xf32>
    %8 = arith.addf %4, %7 : vector<2x16x128xf32>
    %cst = arith.constant 0.000000e+00 : f32
    %9 = vector.broadcast %cst : f32 to vector<2x16x128xf32>
    %10 = arith.maximumf %8, %9 : vector<2x16x128xf32>
    %cst_6 = arith.constant 0.000000e+00 : bf16
    %11 = vector.broadcast %cst_6 : bf16 to vector<2x2x128xbf16>
    %c0_7 = arith.constant 0 : index
    %c0_8 = arith.constant 0 : index
    %c0_9 = arith.constant 0 : index
    %12 = vector.load %arg7[%c0_7, %c0_8, %c0_9] : memref<2x20x128xbf16, #tpu.memory_space<vmem>>, vector<2x2x128xbf16>
    tpu.vector_store %arg7[%c0_7, %c0_8, %c0_9], %11 {strides = array<i32>} : memref<2x20x128xbf16, #tpu.memory_space<vmem>>, vector<2x2x128xbf16>,
    %c0_10 = arith.constant 0 : index
    %c18 = arith.constant 18 : index
    %c0_11 = arith.constant 0 : index
    %13 = vector.load %arg7[%c0_10, %c18, %c0_11] : memref<2x20x128xbf16, #tpu.memory_space<vmem>>, vector<2x2x128xbf16>
    tpu.vector_store %arg7[%c0_10, %c18, %c0_11], %11 {strides = array<i32>} : memref<2x20x128xbf16, #tpu.memory_space<vmem>>, vector<2x2x128xbf16>,
    %14 = arith.truncf %10 : vector<2x16x128xf32> to vector<2x16x128xbf16>
    %c0_12 = arith.constant 0 : index
    %c2 = arith.constant 2 : index
    %c0_13 = arith.constant 0 : index
    %15 = vector.load %arg7[%c0_12, %c2, %c0_13] : memref<2x20x128xbf16, #tpu.memory_space<vmem>>, vector<2x16x128xbf16>
    tpu.vector_store %arg7[%c0_12, %c2, %c0_13], %14 {strides = array<i32>} : memref<2x20x128xbf16, #tpu.memory_space<vmem>>, vector<2x16x128xbf16>,
    %c0_14 = arith.constant 0 : index
    %c0_15 = arith.constant 0 : index
    %c0_16 = arith.constant 0 : index
    %16 = vector.load %arg7[%c0_14, %c0_15, %c0_16] : memref<2x20x128xbf16, #tpu.memory_space<vmem>>, vector<2x16x128xbf16>
    %17 = vector.shape_cast %16 : vector<2x16x128xbf16> to vector<32x128xbf16>
    %c0_17 = arith.constant 0 : index
    %c0_18 = arith.constant 0 : index
    %c0_19 = arith.constant 0 : index
    %18 = vector.load %arg2[%c0_17, %c0_18, %c0_19] : memref<3x128x128xbf16, #tpu.memory_space<vmem>>, vector<1x128x128xbf16>
    %19 = vector.shape_cast %18 : vector<1x128x128xbf16> to vector<128x128xbf16>
    %cst_20 = arith.constant dense<0.000000e+00> : vector<32x128xf32>
    %20 = tpu.matmul %17, %19, %cst_20 {dimension_numbers = #tpu.dot_dimension_numbers<[1], [0], [0], [1], [0, 0, 1, 1], [], []>} : vector<32x128xbf16>, vector<128x128xbf16>, vector<32x128xf32> -> vector<32x128xf32>
    %c0_21 = arith.constant 0 : index
    %c2_22 = arith.constant 2 : index
    %c0_23 = arith.constant 0 : index
    %21 = vector.load %arg7[%c0_21, %c2_22, %c0_23] : memref<2x20x128xbf16, #tpu.memory_space<vmem>>, vector<2x16x128xbf16>
    %22 = vector.shape_cast %21 : vector<2x16x128xbf16> to vector<32x128xbf16>
    %c1 = arith.constant 1 : index
    %c0_24 = arith.constant 0 : index
    %c0_25 = arith.constant 0 : index
    %23 = vector.load %arg2[%c1, %c0_24, %c0_25] : memref<3x128x128xbf16, #tpu.memory_space<vmem>>, vector<1x128x128xbf16>
    %24 = vector.shape_cast %23 : vector<1x128x128xbf16> to vector<128x128xbf16>
    %cst_26 = arith.constant dense<0.000000e+00> : vector<32x128xf32>
    %25 = tpu.matmul %22, %24, %cst_26 {dimension_numbers = #tpu.dot_dimension_numbers<[1], [0], [0], [1], [0, 0, 1, 1], [], []>} : vector<32x128xbf16>, vector<128x128xbf16>, vector<32x128xf32> -> vector<32x128xf32>
    %26 = arith.addf %20, %25 : vector<32x128xf32>
    %c0_27 = arith.constant 0 : index
    %c4 = arith.constant 4 : index
    %c0_28 = arith.constant 0 : index
    %27 = vector.load %arg7[%c0_27, %c4, %c0_28] : memref<2x20x128xbf16, #tpu.memory_space<vmem>>, vector<2x16x128xbf16>
    %28 = vector.shape_cast %27 : vector<2x16x128xbf16> to vector<32x128xbf16>
    %c2_29 = arith.constant 2 : index
    %c0_30 = arith.constant 0 : index
    %c0_31 = arith.constant 0 : index
    %29 = vector.load %arg2[%c2_29, %c0_30, %c0_31] : memref<3x128x128xbf16, #tpu.memory_space<vmem>>, vector<1x128x128xbf16>
    %30 = vector.shape_cast %29 : vector<1x128x128xbf16> to vector<128x128xbf16>
    %cst_32 = arith.constant dense<0.000000e+00> : vector<32x128xf32>
    %31 = tpu.matmul %28, %30, %cst_32 {dimension_numbers = #tpu.dot_dimension_numbers<[1], [0], [0], [1], [0, 0, 1, 1], [], []>} : vector<32x128xbf16>, vector<128x128xbf16>, vector<32x128xf32> -> vector<32x128xf32>
    %32 = arith.addf %26, %31 : vector<32x128xf32>
    %33 = vector.shape_cast %32 : vector<32x128xf32> to vector<2x16x128xf32>
    %34 = arith.addf %0, %33 : vector<2x16x128xf32>
    %c0_33 = arith.constant 0 : index
    %c0_34 = arith.constant 0 : index
    %35 = vector.load %arg3[%c0_33, %c0_34] : memref<1x128xf32, #tpu.memory_space<vmem>>, vector<1x128xf32>
    %36 = vector.shape_cast %35 : vector<1x128xf32> to vector<1x1x128xf32>
    %37 = vector.broadcast %36 : vector<1x1x128xf32> to vector<2x16x128xf32>
    %38 = arith.addf %34, %37 : vector<2x16x128xf32>
    %c0_35 = arith.constant 0 : index
    %c0_36 = arith.constant 0 : index
    %c0_37 = arith.constant 0 : index
    %39 = vector.load %arg6[%c0_35, %c0_36, %c0_37] : memref<2x16x128xf32, #tpu.memory_space<vmem>>, vector<2x16x128xf32>
    tpu.vector_store %arg6[%c0_35, %c0_36, %c0_37], %38 {strides = array<i32>} : memref<2x16x128xf32, #tpu.memory_space<vmem>>, vector<2x16x128xf32>,
    return
  }
  func.func @transform_0(%arg0: i32) -> (i32, i32, i32) {
    %c0_i32 = arith.constant 0 : i32
    %c0_i32_0 = arith.constant 0 : i32
    %c0_i32_1 = arith.constant 0 : i32
    return %arg0, %c0_i32, %c0_i32_0 : i32, i32, i32
  }
  func.func @transform_1(%arg0: i32) -> (i32, i32, i32) {
    %c0_i32 = arith.constant 0 : i32
    %c0_i32_0 = arith.constant 0 : i32
    %c0_i32_1 = arith.constant 0 : i32
    %c0_i32_2 = arith.constant 0 : i32
    return %c0_i32, %c0_i32_0, %c0_i32_1 : i32, i32, i32
  }
  func.func @transform_2(%arg0: i32) -> (i32, i32) {
    %c0_i32 = arith.constant 0 : i32
    %c0_i32_0 = arith.constant 0 : i32
    %c0_i32_1 = arith.constant 0 : i32
    return %c0_i32, %c0_i32_0 : i32, i32
  }
  func.func @transform_3(%arg0: i32) -> (i32, i32) {
    %c0_i32 = arith.constant 0 : i32
    %c0_i32_0 = arith.constant 0 : i32
    %c0_i32_1 = arith.constant 0 : i32
    return %c0_i32, %c0_i32_0 : i32, i32
  }
  func.func @transform_4(%arg0: i32) -> (i32, i32) {
    %c0_i32 = arith.constant 0 : i32
    %c0_i32_0 = arith.constant 0 : i32
    %c0_i32_1 = arith.constant 0 : i32
    return %c0_i32, %c0_i32_0 : i32, i32
  }
  func.func @transform_5(%arg0: i32) -> (i32, i32, i32) {
    %c0_i32 = arith.constant 0 : i32
    %c0_i32_0 = arith.constant 0 : i32
    %c0_i32_1 = arith.constant 0 : i32
    return %arg0, %c0_i32, %c0_i32_0 : i32, i32, i32
  }
}

</mosaic_0001>

<llo_original>
// kernel: tile.18
$region0: #{tile.18}
  #allocation0 [shape = 's32[1]{0}', space=sflag, size = 0x4, scoped, tag = 'scoped memory for tile.18']
  %s0 = inlined_call_operand.vmem [shape: f32[4], index: 0, kind: input, shape index: {}]
  %s1 = inlined_call_operand.vmem [shape: f32[16,4], index: 1, kind: output, shape index: {}]
  // Predicated region
  $region2: #{tile.18} parent=0 // pred_check
    _
  $region3: #{tile.18} parent=0 // pred_check_branch
    %3 = sbr.rel (0) target = $region5
  $region4: #{tile.18} parent=0 // pred_region
    _
  $region5: #{tile.18} parent=0 // pred_fallthru
    _
  %v4 = vld [vmem:[%s0] ss:$0 sm:$0xff]
  %5 = vst [vmem:[%s1] sm:$0xff] %v4
  %s6 = scalar_lea.vmem %s1, 8
  %7 = vst [vmem:[%s6] sm:$0xff] %v4

// kernel: tile.19
$region0: #{tile.19}
  %s0 = inlined_call_operand.vmem [shape: f32[16,4], index: 0, kind: input, shape index: {}]
  %s1 = inlined_call_operand.vmem [shape: f32[64], index: 1, kind: output, shape index: {}]
  $region1: #{tile.19} parent=0
    #allocation0 [shape = 'u8[4096]{0}', space=vmem, size = 0x1000, scoped, tag = 'scoped mem for output reshape']
    %v2 = vld [vmem:[%s0] sm:$0x1]
    %vm3 = vcmask 31744
    %4 = vst.msk [vmem:[#allocation0] sm:$0x1] %vm3, %v2
    %s5 = scalar_lea.vmem %s0, 15
    %v6 = vld [vmem:[%s5] sm:$0x1]
    %7 = vrot.lane.b32.xlu0 %v6, 60
    %v8 = vpop.permute.xlu0 %7
    %vm9 = vcmask 523744
    %10 = vst.msk [vmem:[#allocation0] sm:$0x1] %vm9, %v8
    %s11 = scalar_lea.vmem %s0, 14
    %v12 = vld [vmem:[%s11] sm:$0x1]
    %13 = vrot.lane.b32.xlu0 %v12, 56
    %v14 = vpop.permute.xlu0 %13
    %vm15 = vcmask 490944
    %16 = vst.msk [vmem:[#allocation0] sm:$0x1] %vm15, %v14
    %s17 = scalar_lea.vmem %s0, 13
    %v18 = vld [vmem:[%s17] sm:$0x1]
    %19 = vrot.lane.b32.xlu0 %v18, 52
    %v20 = vpop.permute.xlu0 %19
    %vm21 = vcmask 458144
    %22 = vst.msk [vmem:[#allocation0] sm:$0x1] %vm21, %v20
    %s23 = scalar_lea.vmem %s0, 12
    %v24 = vld [vmem:[%s23] sm:$0x1]
    %25 = vrot.lane.b32.xlu0 %v24, 48
    %v26 = vpop.permute.xlu0 %25
    %vm27 = vcmask 425344
    %28 = vst.msk [vmem:[#allocation0] sm:$0x1] %vm27, %v26
    %s29 = scalar_lea.vmem %s0, 11
    %v30 = vld [vmem:[%s29] sm:$0x1]
    %31 = vrot.lane.b32.xlu0 %v30, 44
    %v32 = vpop.permute.xlu0 %31
    %vm33 = vcmask 392544
    %34 = vst.msk [vmem:[#allocation0] sm:$0x1] %vm33, %v32
    %s35 = scalar_lea.vmem %s0, 10
    %v36 = vld [vmem:[%s35] sm:$0x1]
    %37 = vrot.lane.b32.xlu0 %v36, 40
    %v38 = vpop.permute.xlu0 %37
    %vm39 = vcmask 359744
    %40 = vst.msk [vmem:[#allocation0] sm:$0x1] %vm39, %v38
    %s41 = scalar_lea.vmem %s0, 9
    %v42 = vld [vmem:[%s41] sm:$0x1]
    %43 = vrot.lane.b32.xlu0 %v42, 36
    %v44 = vpop.permute.xlu0 %43
    %vm45 = vcmask 326944
    %46 = vst.msk [vmem:[#allocation0] sm:$0x1] %vm45, %v44
    %s47 = scalar_lea.vmem %s0, 8
    %v48 = vld [vmem:[%s47] sm:$0x1]
    %49 = vrot.lane.b32.xlu0 %v48, 32
    %v50 = vpop.permute.xlu0 %49
    %vm51 = vcmask 294144
    %52 = vst.msk [vmem:[#allocation0] sm:$0x1] %vm51, %v50
    %s53 = scalar_lea.vmem %s0, 7
    %v54 = vld [vmem:[%s53] sm:$0x1]
    %55 = vrot.lane.b32.xlu0 %v54, 28
    %v56 = vpop.permute.xlu0 %55
    %vm57 = vcmask 261344
    %58 = vst.msk [vmem:[#allocation0] sm:$0x1] %vm57, %v56
    %s59 = scalar_lea.vmem %s0, 6
    %v60 = vld [vmem:[%s59] sm:$0x1]
    %61 = vrot.lane.b32.xlu0 %v60, 24
    %v62 = vpop.permute.xlu0 %61
    %vm63 = vcmask 228544
    %64 = vst.msk [vmem:[#allocation0] sm:$0x1] %vm63, %v62
    %s65 = scalar_lea.vmem %s0, 5
    %v66 = vld [vmem:[%s65] sm:$0x1]
    %67 = vrot.lane.b32.xlu0 %v66, 20
    %v68 = vpop.permute.xlu0 %67
    %vm69 = vcmask 195744
    %70 = vst.msk [vmem:[#allocation0] sm:$0x1] %vm69, %v68
    %s71 = scalar_lea.vmem %s0, 4
    %v72 = vld [vmem:[%s71] sm:$0x1]
    %73 = vrot.lane.b32.xlu0 %v72, 16
    %v74 = vpop.permute.xlu0 %73
    %vm75 = vcmask 162944
    %76 = vst.msk [vmem:[#allocation0] sm:$0x1] %vm75, %v74
    %s77 = scalar_lea.vmem %s0, 3
    %v78 = vld [vmem:[%s77] sm:$0x1]
    %79 = vrot.lane.b32.xlu0 %v78, 12
    %v80 = vpop.permute.xlu0 %79
    %vm81 = vcmask 130144
    %82 = vst.msk [vmem:[#allocation0] sm:$0x1] %vm81, %v80
    %s83 = scalar_lea.vmem %s0, 2
    %v84 = vld [vmem:[%s83] sm:$0x1]
    %85 = vrot.lane.b32.xlu0 %v84, 8
    %v86 = vpop.permute.xlu0 %85
    %vm87 = vcmask 97344
    %88 = vst.msk [vmem:[#allocation0] sm:$0x1] %vm87, %v86
    %s89 = scalar_lea.vmem %s0, 1
    %v90 = vld [vmem:[%s89] sm:$0x1]
    %91 = vrot.lane.b32.xlu0 %v90, 4
    %v92 = vpop.permute.xlu0 %91
    %vm93 = vcmask 64544
    %94 = vst.msk [vmem:[#allocation0] sm:$0x1] %vm93, %v92
    %s96 = sshllo.u32 0, 1
    %v98 = vld [vmem:[#allocation0] sm:%s96]
    %s99 = sshllo.u32 0, 1
    %100 = vst [vmem:[%s1] sm:%s99] %v98

// kernel: residual_block2.1
$region0: #{residual_block2.1}
  #allocation0 [shape = 'u32[]', space=smem, size = 0x4, offset = 0x4, fixed_abs, tag = 'smem constant byte address 0x4 - core index']
  #allocation1 [shape = 'u32[144,128]{1,0:T(1,128)}', space=vmem, size = 0x12000, scoped, tag = 'internal scratch']
  #allocation2 [shape = 'bf16[2,20,128]{2,1,0:T(8,128)(2,1)}', space=vmem, size = 0x3000, scoped, tag = 'scratch operand']
  %s0 = inlined_call_operand.vmem [shape: f32[4,16,128], index: 0, kind: input, shape index: {}]
  %s1 = inlined_call_operand.vmem [shape: bf16[3,128,128], index: 1, kind: input, shape index: {}]
  %s2 = inlined_call_operand.vmem [shape: f32[1,128], index: 2, kind: input, shape index: {}]
  %s3 = inlined_call_operand.vmem [shape: f32[1,128], index: 3, kind: input, shape index: {}]
  %s4 = inlined_call_operand.vmem [shape: f32[1,128], index: 4, kind: input, shape index: {}]
  %s5 = inlined_call_operand.vmem [shape: f32[4,16,128], index: 5, kind: output, shape index: {}]
  %s6 = sld [smem:[#allocation0]]
  $region53: #{residual_block2.1} parent=0
    _
  %s8 = ssub.s32 1, %s6
  %s9 = scalar_select 0, %s8, %s6
  loop: start=0, step=1, limit=4
  $region2: #{residual_block2.1} parent=0 // loop_pre_header
    _
  $region3: #{residual_block2.1} parent=0 // loop_header
    %s11 = sphi 0, %s15
    %p12 = scmp.ge.s32.totalorder %s11, 4
    %s21 = sphi 0, %s23
    %s24 = sphi 0, %s21
    %s25 = sphi 0, %s24
    %s41 = sphi 0, %s25
    %s45 = sphi 0, %s45
    %s47 = sphi 0, %s45
    %s48 = sphi 0, %s47
    %s62 = sphi 0, %s48
    %s66 = sphi 0, %s66
    %s68 = sphi 0, %s66
    %s69 = sphi 0, %s68
    %s83 = sphi 0, %s69
    %s87 = sphi 0, %s87
    %s89 = sphi 0, %s87
    %s90 = sphi 0, %s89
    %s104 = sphi 0, %s90
    %s108 = sphi 0, %s108
    %s110 = sphi 0, %s108
    %s111 = sphi 0, %s110
    %s125 = sphi 0, %s111
    %s131 = sphi 0, %s133
    %s134 = sphi 0, %s131
    %s135 = sphi 0, %s134
    %s151 = sphi 0, %s135
  $region4: #{residual_block2.1} parent=0 // loop_header_branch
    %14 = sbr.rel (%p12) target = $region8
  $region5: #{residual_block2.1} parent=0 // loop_body
    %s16 = ssub.s32 %s11, 1
    %s17 = ssub.s32 %s11, 2
    %s18 = sadd.s32 %s11, 1
    %s19 = ssub.s32 %s11, %s18
    %p20 = scmp.eq.s32.totalorder %s19, 0
    %s22 = sadd.s32 %s21, 1
    %s23 = scalar_select %p20, %s21, %s22
    %p26 = pneg %p20
    %p27 = scmp.eq.s32.totalorder %s11, 1
    %p28 = por %p26, %p27
    %p29 = scmp.ne.s32.totalorder %s21, %s24
    %p30 = scmp.eq.s32.totalorder %s11, 0
    %p31 = por %p29, %p30
    %p32 = scmp.ne.s32.totalorder %s21, %s24
    %p33 = scmp.eq.s32.totalorder %s16, 1
    %p34 = por %p32, %p33
    %p35 = scmp.ne.s32.totalorder %s24, %s25
    %p36 = scmp.eq.s32.totalorder %s16, 0
    %p37 = por %p35, %p36
    %p38 = scmp.ne.s32.totalorder %s24, %s25
    %p39 = scmp.eq.s32.totalorder %s17, 1
    %p40 = por %p38, %p39
    %p42 = scmp.ne.s32.totalorder %s25, %s41
    %p43 = scmp.eq.s32.totalorder %s17, 0
    %p44 = por %p42, %p43
    %s46 = sadd.s32 %s45, 1
    %p49 = scmp.eq.s32.totalorder %s11, 1
    %p50 = scmp.ne.s32.totalorder %s45, %s47
    %p51 = scmp.eq.s32.totalorder %s11, 0
    %p52 = por %p50, %p51
    %p53 = scmp.ne.s32.totalorder %s45, %s47
    %p54 = scmp.eq.s32.totalorder %s16, 1
    %p55 = por %p53, %p54
    %p56 = scmp.ne.s32.totalorder %s47, %s48
    %p57 = scmp.eq.s32.totalorder %s16, 0
    %p58 = por %p56, %p57
    %p59 = scmp.ne.s32.totalorder %s47, %s48
    %p60 = scmp.eq.s32.totalorder %s17, 1
    %p61 = por %p59, %p60
    %p63 = scmp.ne.s32.totalorder %s48, %s62
    %p64 = scmp.eq.s32.totalorder %s17, 0
    %p65 = por %p63, %p64
    %s67 = sadd.s32 %s66, 1
    %p70 = scmp.eq.s32.totalorder %s11, 1
    %p71 = scmp.ne.s32.totalorder %s66, %s68
    %p72 = scmp.eq.s32.totalorder %s11, 0
    %p73 = por %p71, %p72
    %p74 = scmp.ne.s32.totalorder %s66, %s68
    %p75 = scmp.eq.s32.totalorder %s16, 1
    %p76 = por %p74, %p75
    %p77 = scmp.ne.s32.totalorder %s68, %s69
    %p78 = scmp.eq.s32.totalorder %s16, 0
    %p79 = por %p77, %p78
    %p80 = scmp.ne.s32.totalorder %s68, %s69
    %p81 = scmp.eq.s32.totalorder %s17, 1
    %p82 = por %p80, %p81
    %p84 = scmp.ne.s32.totalorder %s69, %s83
    %p85 = scmp.eq.s32.totalorder %s17, 0
    %p86 = por %p84, %p85
    %s88 = sadd.s32 %s87, 1
    %p91 = scmp.eq.s32.totalorder %s11, 1
    %p92 = scmp.ne.s32.totalorder %s87, %s89
    %p93 = scmp.eq.s32.totalorder %s11, 0
    %p94 = por %p92, %p93
    %p95 = scmp.ne.s32.totalorder %s87, %s89
    %p96 = scmp.eq.s32.totalorder %s16, 1
    %p97 = por %p95, %p96
    %p98 = scmp.ne.s32.totalorder %s89, %s90
    %p99 = scmp.eq.s32.totalorder %s16, 0
    %p100 = por %p98, %p99
    %p101 = scmp.ne.s32.totalorder %s89, %s90
    %p102 = scmp.eq.s32.totalorder %s17, 1
    %p103 = por %p101, %p102
    %p105 = scmp.ne.s32.totalorder %s90, %s104
    %p106 = scmp.eq.s32.totalorder %s17, 0
    %p107 = por %p105, %p106
    %s109 = sadd.s32 %s108, 1
    %p112 = scmp.eq.s32.totalorder %s11, 1
    %p113 = scmp.ne.s32.totalorder %s108, %s110
    %p114 = scmp.eq.s32.totalorder %s11, 0
    %p115 = por %p113, %p114
    %p116 = scmp.ne.s32.totalorder %s108, %s110
    %p117 = scmp.eq.s32.totalorder %s16, 1
    %p118 = por %p116, %p117
    %p119 = scmp.ne.s32.totalorder %s110, %s111
    %p120 = scmp.eq.s32.totalorder %s16, 0
    %p121 = por %p119, %p120
    %p122 = scmp.ne.s32.totalorder %s110, %s111
    %p123 = scmp.eq.s32.totalorder %s17, 1
    %p124 = por %p122, %p123
    %p126 = scmp.ne.s32.totalorder %s111, %s125
    %p127 = scmp.eq.s32.totalorder %s17, 0
    %p128 = por %p126, %p127
    %s129 = ssub.s32 %s11, %s18
    %p130 = scmp.eq.s32.totalorder %s129, 0
    %s132 = sadd.s32 %s131, 1
    %s133 = scalar_select %p130, %s131, %s132
    %p136 = pneg %p130
    %p137 = scmp.eq.s32.totalorder %s11, 1
    %p138 = por %p136, %p137
    %p139 = scmp.ne.s32.totalorder %s131, %s134
    %p140 = scmp.eq.s32.totalorder %s11, 0
    %p141 = por %p139, %p140
    %p142 = scmp.ne.s32.totalorder %s131, %s134
    %p143 = scmp.eq.s32.totalorder %s16, 1
    %p144 = por %p142, %p143
    %p145 = scmp.ne.s32.totalorder %s134, %s135
    %p146 = scmp.eq.s32.totalorder %s16, 0
    %p147 = por %p145, %p146
    %p148 = scmp.ne.s32.totalorder %s134, %s135
    %p149 = scmp.eq.s32.totalorder %s17, 1
    %p150 = por %p148, %p149
    %p152 = scmp.ne.s32.totalorder %s135, %s151
    %p153 = scmp.eq.s32.totalorder %s17, 0
    %p154 = por %p152, %p153
    %p155 = scmp.le.s32.totalorder 1, %s11
    %p156 = scmp.lt.s32.totalorder %s11, 3
    %p157 = pnand %p155, %p156
    %p158 = pneg %p157
    // Predicated region
    $region9: #{residual_block2.1} parent=5 // pred_check
      _
    $region10: #{residual_block2.1} parent=5 // pred_check_branch
      %160 = sbr.rel (%p157) target = $region12
    $region11: #{residual_block2.1} parent=5 // pred_region
      %s161 = ssub.s32 %s11, 1
      // Predicated region
      $region13: #{residual_block2.1} parent=11 // pred_check
        %p162 = pneg %p58
      $region14: #{residual_block2.1} parent=11 // pred_check_branch
        %164 = sbr.rel (%p162) target = $region16
      $region15: #{residual_block2.1} parent=11 // pred_region
        _
      $region16: #{residual_block2.1} parent=11 // pred_fallthru
        _
      // Predicated region
      $region17: #{residual_block2.1} parent=11 // pred_check
        %p165 = pneg %p79
      $region18: #{residual_block2.1} parent=11 // pred_check_branch
        %167 = sbr.rel (%p165) target = $region20
      $region19: #{residual_block2.1} parent=11 // pred_region
        _
      $region20: #{residual_block2.1} parent=11 // pred_fallthru
        _
      // Predicated region
      $region21: #{residual_block2.1} parent=11 // pred_check
        %p168 = pneg %p100
      $region22: #{residual_block2.1} parent=11 // pred_check_branch
        %170 = sbr.rel (%p168) target = $region24
      $region23: #{residual_block2.1} parent=11 // pred_region
        _
      $region24: #{residual_block2.1} parent=11 // pred_fallthru
        _
      // Predicated region
      $region25: #{residual_block2.1} parent=11 // pred_check
        %p171 = pneg %p121
      $region26: #{residual_block2.1} parent=11 // pred_check_branch
        %173 = sbr.rel (%p171) target = $region28
      $region27: #{residual_block2.1} parent=11 // pred_region
        _
      $region28: #{residual_block2.1} parent=11 // pred_fallthru
        _
    $region12: #{residual_block2.1} parent=5 // pred_fallthru
      _
    %p174 = scmp.lt.s32.totalorder %s11, 2
    // Predicated region
    $region29: #{residual_block2.1} parent=5 // pred_check
      %p175 = pneg %p174
    $region30: #{residual_block2.1} parent=5 // pred_check_branch
      %177 = sbr.rel (%p175) target = $region32
    $region31: #{residual_block2.1} parent=5 // pred_region
      // Predicated region
      $region33: #{residual_block2.1} parent=31 // pred_check
        %p178 = pneg %p31
      $region34: #{residual_block2.1} parent=31 // pred_check_branch
        %180 = sbr.rel (%p178) target = $region36
      $region35: #{residual_block2.1} parent=31 // pred_region
        %s181 = smul.u32 2, %s11
        %p182 = scmp.lt.s32.totalorder %s181, 3
        %s183 = scalar_select %p182, %s181, 3
        %s184 = smul.addr %s183, 2
        %s185 = smul.addr %s184, 8
        %s186 = scalar_lea.vmem %s0, %s185
        %s187 = smul.u32 2, %s11
      $region36: #{residual_block2.1} parent=31 // pred_fallthru
        _
    $region32: #{residual_block2.1} parent=5 // pred_fallthru
      _
    %p188 = scmp.le.s32.totalorder 1, %s11
    %p189 = scmp.lt.s32.totalorder %s11, 3
    %p190 = pnand %p188, %p189
    %p191 = pneg %p190
    // Predicated region
    $region37: #{residual_block2.1} parent=5 // pred_check
      _
    $region38: #{residual_block2.1} parent=5 // pred_check_branch
      %193 = sbr.rel (%p190) target = $region40
    $region39: #{residual_block2.1} parent=5 // pred_region
      %s194 = ssub.s32 %s11, 1
      %s195 = smul.u32 2, %s16
      %p196 = scmp.lt.s32.totalorder %s195, 3
      %s197 = scalar_select %p196, %s195, 3
      %s198 = smul.addr %s197, 2
      %s199 = smul.addr %s198, 8
      %s200 = scalar_lea.vmem %s0, %s199
      %p201 = pneg %p37
      %p202 = pneg %p34
      %p203 = pneg %p58
      %p204 = pneg %p55
      %p205 = pneg %p79
      %p206 = pneg %p76
      %p207 = pneg %p100
      %p208 = pneg %p97
      %p209 = pneg %p121
      %p210 = pneg %p118
      %p211 = pneg %p147
      %p212 = pneg %p144
      %s213 = smul.u32 2, %s16
      %p214 = scmp.lt.s32.totalorder %s213, 3
      %s215 = scalar_select %p214, %s213, 3
      %s216 = smul.addr %s215, 2
      %s217 = smul.addr %s216, 8
      %s218 = scalar_lea.vmem %s5, %s217
      %s219 = smul.u32 2, %s16
      %p220 = scmp.lt.s32.totalorder %s219, 3
      %s221 = scalar_select %p220, %s219, 3
      %s222 = smul.addr %s221, 2
      %s223 = smul.addr %s222, 8
      %s224 = scalar_lea.vmem %s0, %s223
      %s225 = smul.u32 2, %s16
      %s226 = smul.u32 2, %s16
      %p227 = scmp.lt.s32.totalorder %s226, 3
      %s228 = scalar_select %p227, %s226, 3
      %s229 = smul.addr %s228, 2
      %s230 = smul.addr %s229, 8
      %s231 = scalar_lea.vmem %s5, %s230
      %s232 = smul.u32 2, %s16
      %v234 = vld [vmem:[%s224] sm:$0xff]
      %v235 = vld [vmem:[%s224 + $0x8] sm:$0xff]
      %v236 = vld [vmem:[%s224 + $0x10] sm:$0xff]
      %v237 = vld [vmem:[%s224 + $0x18] sm:$0xff]
      %v238 = vld [vmem:[%s3] sm:$0x1]
      %v240 = vlaneseq
      %v241 = vshrl.u32 %v240, 7
      %v242 = vsub.s32 0, %v241
      %v243 = vrot.slane %v238, %v242
      %v245 = vmul.f32 %v234, %v243
      %v246 = vmul.f32 %v235, %v243
      %v247 = vmul.f32 %v236, %v243
      %v248 = vmul.f32 %v237, %v243
      %v249 = vld [vmem:[%s4] sm:$0x1]
      %v251 = vlaneseq
      %v252 = vshrl.u32 %v251, 7
      %v253 = vsub.s32 0, %v252
      %v254 = vrot.slane %v249, %v253
      %v256 = vadd.f32 %v245, %v254
      %v257 = vadd.f32 %v246, %v254
      %v258 = vadd.f32 %v247, %v254
      %v259 = vadd.f32 %v248, %v254
      %v260 = vmax.f32 %v256, 0.0
      %v261 = vmax.f32 %v257, 0.0
      %v262 = vmax.f32 %v258, 0.0
      %v263 = vmax.f32 %v259, 0.0
      %264 = vst [vmem:[#allocation2] sm:$0x1] 0
      %265 = vst [vmem:[#allocation2 + $0xc] sm:$0x1] 0
      %266 = vst [vmem:[#allocation2 + $0x8] sm:$0x2] 0
      %267 = vst [vmem:[#allocation2 + $0x14] sm:$0x2] 0
      %v268 = vpack.c.bf16 %v261, %v260
      %v269 = vpack.c.bf16 %v263, %v262
      %v272 = vunpack.c.l.b16 %v268
      %v273 = vunpack.c.h.b16 %v268
      %v274 = vunpack.c.l.b16 %v269
      %v275 = vunpack.c.h.b16 %v269
      %v276 = vpack.c.b16 %v272, %v272
      %v277 = vpack.c.b16 %v273, %v273
      %v278 = vpack.c.b16 %v274, %v274
      %v279 = vpack.c.b16 %v275, %v275
      %vm280 = vcmask 1040384
      %vm281 = vcmask 1044484
      %vm282 = vmor %vm280, %vm281
      %v283 = vrot.slane %v276, 7
      %v284 = vrot.slane %v283, 4
      %v285 = vrot.slane %v277, 7
      %v286 = vsel %vm282, %v284, %v285
      %v287 = vrot.slane %v285, 4
      %v288 = vrot.slane %v278, 7
      %v289 = vrot.slane %v288, 4
      %v290 = vrot.slane %v279, 7
      %v291 = vsel %vm282, %v289, %v290
      %v292 = vrot.slane %v290, 4
      %299 = vst [vmem:[#allocation2] sm:$0xe] %v283
      %300 = vst [vmem:[#allocation2 + $0x4] sm:$0xf] %v286
      %301 = vst [vmem:[#allocation2 + $0x8] sm:$0x1] %v287
      %302 = vst [vmem:[#allocation2 + $0xc] sm:$0xe] %v288
      %303 = vst [vmem:[#allocation2 + $0x10] sm:$0xf] %v291
      %304 = vst [vmem:[#allocation2 + $0x14] sm:$0x1] %v292
      %v305 = vld [vmem:[#allocation2] sm:$0xf]
      %v306 = vld [vmem:[#allocation2 + $0x4] sm:$0xf]
      %v307 = vld [vmem:[#allocation2 + $0xc] sm:$0xf]
      %v308 = vld [vmem:[#allocation2 + $0x10] sm:$0xf]
      %v309 = vld [vmem:[%s1] sm:$0xf]
      %v310 = vld [vmem:[%s1 + $0x4] sm:$0xf]
      %v311 = vld [vmem:[%s1 + $0x8] sm:$0xf]
      %v312 = vld [vmem:[%s1 + $0xc] sm:$0xf]
      %v313 = vld [vmem:[%s1 + $0x10] sm:$0xf]
      %v314 = vld [vmem:[%s1 + $0x14] sm:$0xf]
      %v315 = vld [vmem:[%s1 + $0x18] sm:$0xf]
      %v316 = vld [vmem:[%s1 + $0x1c] sm:$0xf]
      %v317 = vld [vmem:[%s1 + $0x20] sm:$0xf]
      %v318 = vld [vmem:[%s1 + $0x24] sm:$0xf]
      %v319 = vld [vmem:[%s1 + $0x28] sm:$0xf]
      %v320 = vld [vmem:[%s1 + $0x2c] sm:$0xf]
      %v321 = vld [vmem:[%s1 + $0x30] sm:$0xf]
      %v322 = vld [vmem:[%s1 + $0x34] sm:$0xf]
      %v323 = vld [vmem:[%s1 + $0x38] sm:$0xf]
      %v324 = vld [vmem:[%s1 + $0x3c] sm:$0xf]
      %v325 = vld [vmem:[#allocation2] sm:$0xe]
      %v326 = vld [vmem:[#allocation2 + $0x8] sm:$0x1]
      %v327 = vld [vmem:[#allocation2 + $0xc] sm:$0xe]
      %v328 = vld [vmem:[#allocation2 + $0x14] sm:$0x1]
      %vm335 = vcmask 1042432
      %vm336 = vcmask 1046532
      %vm337 = vmor %vm335, %vm336
      %v338 = vrot.slane %v325, 5
      %v339 = vrot.slane %v338, 4
      %v340 = vrot.slane %v306, 5
      %v341 = vsel %vm337, %v339, %v340
      %v342 = vrot.slane %v340, 4
      %v343 = vrot.slane %v326, 5
      %v344 = vsel %vm337, %v342, %v343
      %v345 = vrot.slane %v327, 5
      %v346 = vrot.slane %v345, 4
      %v347 = vrot.slane %v308, 5
      %v348 = vsel %vm337, %v346, %v347
      %v349 = vrot.slane %v347, 4
      %v350 = vrot.slane %v328, 5
      %v351 = vsel %vm337, %v349, %v350
      %s352 = scalar_lea.vmem %s1, 64
      %v353 = vld [vmem:[%s352] sm:$0xf]
      %v354 = vld [vmem:[%s352 + $0x4] sm:$0xf]
      %v355 = vld [vmem:[%s352 + $0x8] sm:$0xf]
      %v356 = vld [vmem:[%s352 + $0xc] sm:$0xf]
      %v357 = vld [vmem:[%s352 + $0x10] sm:$0xf]
      %v358 = vld [vmem:[%s352 + $0x14] sm:$0xf]
      %v359 = vld [vmem:[%s352 + $0x18] sm:$0xf]
      %v360 = vld [vmem:[%s352 + $0x1c] sm:$0xf]
      %v361 = vld [vmem:[%s352 + $0x20] sm:$0xf]
      %v362 = vld [vmem:[%s352 + $0x24] sm:$0xf]
      %v363 = vld [vmem:[%s352 + $0x28] sm:$0xf]
      %v364 = vld [vmem:[%s352 + $0x2c] sm:$0xf]
      %v365 = vld [vmem:[%s352 + $0x30] sm:$0xf]
      %v366 = vld [vmem:[%s352 + $0x34] sm:$0xf]
      %v367 = vld [vmem:[%s352 + $0x38] sm:$0xf]
      %v368 = vld [vmem:[%s352 + $0x3c] sm:$0xf]
      %v369 = vunpack.c.l.b16 %v341
      %v370 = vunpack.c.l.b16 %v344
      %v371 = vunpack.c.l.b16 %v348
      %v372 = vunpack.c.l.b16 %v351
      %v373 = vpack.c.b16 %v370, %v369
      %v374 = vpack.c.b16 %v372, %v371
      %v393 = vunpack.c.l.b16 %v353
      %v394 = vunpack.c.l.b16 %v354
      %v395 = vunpack.c.l.b16 %v355
      %v396 = vunpack.c.l.b16 %v356
      %v397 = vunpack.c.l.b16 %v357
      %v398 = vunpack.c.l.b16 %v358
      %v399 = vunpack.c.l.b16 %v359
      %v400 = vunpack.c.l.b16 %v360
      %v401 = vunpack.c.l.b16 %v361
      %v402 = vunpack.c.l.b16 %v362
      %v403 = vunpack.c.l.b16 %v363
      %v404 = vunpack.c.l.b16 %v364
      %v405 = vunpack.c.l.b16 %v365
      %v406 = vunpack.c.l.b16 %v366
      %v407 = vunpack.c.l.b16 %v367
      %v408 = vunpack.c.l.b16 %v368
      %v409 = vpack.c.b16 %v394, %v393
      %v410 = vpack.c.b16 %v396, %v395
      %v411 = vpack.c.b16 %v398, %v397
      %v412 = vpack.c.b16 %v400, %v399
      %v413 = vpack.c.b16 %v402, %v401
      %v414 = vpack.c.b16 %v404, %v403
      %v415 = vpack.c.b16 %v406, %v405
      %v416 = vpack.c.b16 %v408, %v407
      %425 = vmatprep.subr.bf16.mxu0 0
      %426 = vmatpush1.bf16.msra.mxu0 %v409
      %427 = vmatprep.subr.bf16.mxu0 0
      %428 = vmatpush1.bf16.msra.mxu0 %v410
      %429 = vmatprep.subr.bf16.mxu0 0
      %430 = vmatpush1.bf16.msra.mxu0 %v411
      %431 = vmatprep.subr.bf16.mxu0 0
      %432 = vmatpush1.bf16.msra.mxu0 %v412
      %433 = vmatprep.subr.bf16.mxu0 0
      %434 = vmatpush1.bf16.msra.mxu0 %v413
      %435 = vmatprep.subr.bf16.mxu0 0
      %436 = vmatpush1.bf16.msra.mxu0 %v414
      %437 = vmatprep.subr.bf16.mxu0 0
      %438 = vmatpush1.bf16.msra.mxu0 %v415
      %439 = vmatprep.subr.bf16.mxu0 0
      %440 = vmatpush1.bf16.msra.mxu0 %v416
      %441 = vmatprep.subr.bf16.mxu0 0
      %442 = vmatpush1.bf16.msra.mxu0 0
      %443 = vmatprep.subr.bf16.mxu0 0
      %444 = vmatpush1.bf16.msra.mxu0 0
      %445 = vmatprep.subr.bf16.mxu0 0
      %446 = vmatpush1.bf16.msra.mxu0 0
      %447 = vmatprep.subr.bf16.mxu0 0
      %448 = vmatpush1.bf16.msra.mxu0 0
      %449 = vmatprep.subr.bf16.mxu0 0
      %450 = vmatpush1.bf16.msra.mxu0 0
      %451 = vmatprep.subr.bf16.mxu0 0
      %452 = vmatpush1.bf16.msra.mxu0 0
      %453 = vmatprep.subr.bf16.mxu0 0
      %454 = vmatpush1.bf16.msra.mxu0 0
      %455 = vmatprep.subr.bf16.mxu0 0
      %456 = vmatpush1.bf16.msra.mxu0 0
      %457 = vmatprep.mubr.bf16.mxu0 0
      %458 = vmatmul.mubr.bf16.gmra.mrb[0].mxu0 %v373
      %v459 = vpop.f32.mrb[0].mxu0
      %v460 = vadd.f32 0.0, %v459
      %v461 = vpop.f32.mrb[0].mxu0
      %v462 = vpop.f32.mrb[0].mxu0
      %v463 = vadd.f32 0.0, %v462
      %v464 = vpop.f32.mrb[0].mxu0
      %465 = vmatprep.mubr.bf16.mxu0 0
      %466 = vmatmul.mubr.bf16.gmra.mrb[0].mxu0 %v374
      %v467 = vpop.f32.mrb[0].mxu0
      %v468 = vadd.f32 0.0, %v467
      %v469 = vpop.f32.mrb[0].mxu0
      %v470 = vpop.f32.mrb[0].mxu0
      %v471 = vadd.f32 0.0, %v470
      %v472 = vpop.f32.mrb[0].mxu0
      %473 = vdwg.mxu0
      %v476 = vunpack.c.l.b16 %v305
      %v477 = vunpack.c.l.b16 %v306
      %v478 = vunpack.c.l.b16 %v307
      %v479 = vunpack.c.l.b16 %v308
      %v480 = vpack.c.b16 %v477, %v476
      %v481 = vpack.c.b16 %v479, %v478
      %v500 = vunpack.c.l.b16 %v309
      %v501 = vunpack.c.l.b16 %v310
      %v502 = vunpack.c.l.b16 %v311
      %v503 = vunpack.c.l.b16 %v312
      %v504 = vunpack.c.l.b16 %v313
      %v505 = vunpack.c.l.b16 %v314
      %v506 = vunpack.c.l.b16 %v315
      %v507 = vunpack.c.l.b16 %v316
      %v508 = vunpack.c.l.b16 %v317
      %v509 = vunpack.c.l.b16 %v318
      %v510 = vunpack.c.l.b16 %v319
      %v511 = vunpack.c.l.b16 %v320
      %v512 = vunpack.c.l.b16 %v321
      %v513 = vunpack.c.l.b16 %v322
      %v514 = vunpack.c.l.b16 %v323
      %v515 = vunpack.c.l.b16 %v324
      %v516 = vpack.c.b16 %v501, %v500
      %v517 = vpack.c.b16 %v503, %v502
      %v518 = vpack.c.b16 %v505, %v504
      %v519 = vpack.c.b16 %v507, %v506
      %v520 = vpack.c.b16 %v509, %v508
      %v521 = vpack.c.b16 %v511, %v510
      %v522 = vpack.c.b16 %v513, %v512
      %v523 = vpack.c.b16 %v515, %v514
      %532 = vmatprep.subr.bf16.mxu0 0
      %533 = vmatpush1.bf16.msra.mxu0 %v516
      %534 = vmatprep.subr.bf16.mxu0 0
      %535 = vmatpush1.bf16.msra.mxu0 %v517
      %536 = vmatprep.subr.bf16.mxu0 0
      %537 = vmatpush1.bf16.msra.mxu0 %v518
      %538 = vmatprep.subr.bf16.mxu0 0
      %539 = vmatpush1.bf16.msra.mxu0 %v519
      %540 = vmatprep.subr.bf16.mxu0 0
      %541 = vmatpush1.bf16.msra.mxu0 %v520
      %542 = vmatprep.subr.bf16.mxu0 0
      %543 = vmatpush1.bf16.msra.mxu0 %v521
      %544 = vmatprep.subr.bf16.mxu0 0
      %545 = vmatpush1.bf16.msra.mxu0 %v522
      %546 = vmatprep.subr.bf16.mxu0 0
      %547 = vmatpush1.bf16.msra.mxu0 %v523
      %548 = vmatprep.subr.bf16.mxu0 0
      %549 = vmatpush1.bf16.msra.mxu0 0
      %550 = vmatprep.subr.bf16.mxu0 0
      %551 = vmatpush1.bf16.msra.mxu0 0
      %552 = vmatprep.subr.bf16.mxu0 0
      %553 = vmatpush1.bf16.msra.mxu0 0
      %554 = vmatprep.subr.bf16.mxu0 0
      %555 = vmatpush1.bf16.msra.mxu0 0
      %556 = vmatprep.subr.bf16.mxu0 0
      %557 = vmatpush1.bf16.msra.mxu0 0
      %558 = vmatprep.subr.bf16.mxu0 0
      %559 = vmatpush1.bf16.msra.mxu0 0
      %560 = vmatprep.subr.bf16.mxu0 0
      %561 = vmatpush1.bf16.msra.mxu0 0
      %562 = vmatprep.subr.bf16.mxu0 0
      %563 = vmatpush1.bf16.msra.mxu0 0
      %564 = vmatprep.mubr.bf16.mxu0 0
      %565 = vmatmul.mubr.bf16.gmra.mrb[0].mxu0 %v480
      %v566 = vpop.f32.mrb[0].mxu0
      %v567 = vadd.f32 %v460, %v566
      %v568 = vpop.f32.mrb[0].mxu0
      %v569 = vpop.f32.mrb[0].mxu0
      %v570 = vadd.f32 %v463, %v569
      %v571 = vpop.f32.mrb[0].mxu0
      %572 = vmatprep.mubr.bf16.mxu0 0
      %573 = vmatmul.mubr.bf16.gmra.mrb[0].mxu0 %v481
      %v574 = vpop.f32.mrb[0].mxu0
      %v575 = vadd.f32 %v468, %v574
      %v576 = vpop.f32.mrb[0].mxu0
      %v577 = vpop.f32.mrb[0].mxu0
      %v578 = vadd.f32 %v471, %v577
      %v579 = vpop.f32.mrb[0].mxu0
      %580 = vdwg.mxu0
      %v581 = vld [vmem:[#allocation2] sm:$0xc]
      %v582 = vld [vmem:[#allocation2 + $0x8] sm:$0x3]
      %v583 = vld [vmem:[#allocation2 + $0xc] sm:$0xc]
      %v584 = vld [vmem:[#allocation2 + $0x14] sm:$0x3]
      %vm589 = vcmask 1041408
      %vm590 = vcmask 1045508
      %vm591 = vmor %vm589, %vm590
      %v592 = vrot.slane %v581, 6
      %v593 = vrot.slane %v592, 4
      %v594 = vrot.slane %v306, 6
      %v595 = vsel %vm591, %v593, %v594
      %v596 = vrot.slane %v594, 4
      %v597 = vrot.slane %v582, 6
      %v598 = vsel %vm591, %v596, %v597
      %v599 = vrot.slane %v583, 6
      %v600 = vrot.slane %v599, 4
      %v601 = vrot.slane %v308, 6
      %v602 = vsel %vm591, %v600, %v601
      %v603 = vrot.slane %v601, 4
      %v604 = vrot.slane %v584, 6
      %v605 = vsel %vm591, %v603, %v604
      %s606 = scalar_lea.vmem %s1, 128
      %v607 = vld [vmem:[%s606] sm:$0xf]
      %v608 = vld [vmem:[%s606 + $0x4] sm:$0xf]
      %v609 = vld [vmem:[%s606 + $0x8] sm:$0xf]
      %v610 = vld [vmem:[%s606 + $0xc] sm:$0xf]
      %v611 = vld [vmem:[%s606 + $0x10] sm:$0xf]
      %v612 = vld [vmem:[%s606 + $0x14] sm:$0xf]
      %v613 = vld [vmem:[%s606 + $0x18] sm:$0xf]
      %v614 = vld [vmem:[%s606 + $0x1c] sm:$0xf]
      %v615 = vld [vmem:[%s606 + $0x20] sm:$0xf]
      %v616 = vld [vmem:[%s606 + $0x24] sm:$0xf]
      %v617 = vld [vmem:[%s606 + $0x28] sm:$0xf]
      %v618 = vld [vmem:[%s606 + $0x2c] sm:$0xf]
      %v619 = vld [vmem:[%s606 + $0x30] sm:$0xf]
      %v620 = vld [vmem:[%s606 + $0x34] sm:$0xf]
      %v621 = vld [vmem:[%s606 + $0x38] sm:$0xf]
      %v622 = vld [vmem:[%s606 + $0x3c] sm:$0xf]
      %v623 = vunpack.c.l.b16 %v595
      %v624 = vunpack.c.l.b16 %v598
      %v625 = vunpack.c.l.b16 %v602
      %v626 = vunpack.c.l.b16 %v605
      %v627 = vpack.c.b16 %v624, %v623
      %v628 = vpack.c.b16 %v626, %v625
      %v647 = vunpack.c.l.b16 %v607
      %v648 = vunpack.c.l.b16 %v608
      %v649 = vunpack.c.l.b16 %v609
      %v650 = vunpack.c.l.b16 %v610
      %v651 = vunpack.c.l.b16 %v611
      %v652 = vunpack.c.l.b16 %v612
      %v653 = vunpack.c.l.b16 %v613
      %v654 = vunpack.c.l.b16 %v614
      %v655 = vunpack.c.l.b16 %v615
      %v656 = vunpack.c.l.b16 %v616
      %v657 = vunpack.c.l.b16 %v617
      %v658 = vunpack.c.l.b16 %v618
      %v659 = vunpack.c.l.b16 %v619
      %v660 = vunpack.c.l.b16 %v620
      %v661 = vunpack.c.l.b16 %v621
      %v662 = vunpack.c.l.b16 %v622
      %v663 = vpack.c.b16 %v648, %v647
      %v664 = vpack.c.b16 %v650, %v649
      %v665 = vpack.c.b16 %v652, %v651
      %v666 = vpack.c.b16 %v654, %v653
      %v667 = vpack.c.b16 %v656, %v655
      %v668 = vpack.c.b16 %v658, %v657
      %v669 = vpack.c.b16 %v660, %v659
      %v670 = vpack.c.b16 %v662, %v661
      %679 = vmatprep.subr.bf16.mxu0 0
      %680 = vmatpush1.bf16.msra.mxu0 %v663
      %681 = vmatprep.subr.bf16.mxu0 0
      %682 = vmatpush1.bf16.msra.mxu0 %v664
      %683 = vmatprep.subr.bf16.mxu0 0
      %684 = vmatpush1.bf16.msra.mxu0 %v665
      %685 = vmatprep.subr.bf16.mxu0 0
      %686 = vmatpush1.bf16.msra.mxu0 %v666
      %687 = vmatprep.subr.bf16.mxu0 0
      %688 = vmatpush1.bf16.msra.mxu0 %v667
      %689 = vmatprep.subr.bf16.mxu0 0
      %690 = vmatpush1.bf16.msra.mxu0 %v668
      %691 = vmatprep.subr.bf16.mxu0 0
      %692 = vmatpush1.bf16.msra.mxu0 %v669
      %693 = vmatprep.subr.bf16.mxu0 0
      %694 = vmatpush1.bf16.msra.mxu0 %v670
      %695 = vmatprep.subr.bf16.mxu0 0
      %696 = vmatpush1.bf16.msra.mxu0 0
      %697 = vmatprep.subr.bf16.mxu0 0
      %698 = vmatpush1.bf16.msra.mxu0 0
      %699 = vmatprep.subr.bf16.mxu0 0
      %700 = vmatpush1.bf16.msra.mxu0 0
      %701 = vmatprep.subr.bf16.mxu0 0
      %702 = vmatpush1.bf16.msra.mxu0 0
      %703 = vmatprep.subr.bf16.mxu0 0
      %704 = vmatpush1.bf16.msra.mxu0 0
      %705 = vmatprep.subr.bf16.mxu0 0
      %706 = vmatpush1.bf16.msra.mxu0 0
      %707 = vmatprep.subr.bf16.mxu0 0
      %708 = vmatpush1.bf16.msra.mxu0 0
      %709 = vmatprep.subr.bf16.mxu0 0
      %710 = vmatpush1.bf16.msra.mxu0 0
      %711 = vmatprep.mubr.bf16.mxu0 0
      %712 = vmatmul.mubr.bf16.gmra.mrb[0].mxu0 %v627
      %v713 = vpop.f32.mrb[0].mxu0
      %v714 = vadd.f32 0.0, %v713
      %v715 = vpop.f32.mrb[0].mxu0
      %v716 = vpop.f32.mrb[0].mxu0
      %v717 = vadd.f32 0.0, %v716
      %v718 = vpop.f32.mrb[0].mxu0
      %719 = vmatprep.mubr.bf16.mxu0 0
      %720 = vmatmul.mubr.bf16.gmra.mrb[0].mxu0 %v628
      %v721 = vpop.f32.mrb[0].mxu0
      %v722 = vadd.f32 0.0, %v721
      %v723 = vpop.f32.mrb[0].mxu0
      %v724 = vpop.f32.mrb[0].mxu0
      %v725 = vadd.f32 0.0, %v724
      %v726 = vpop.f32.mrb[0].mxu0
      %727 = vdwg.mxu0
      %v728 = vadd.f32 %v567, %v714
      %v729 = vadd.f32 %v570, %v717
      %v730 = vadd.f32 %v575, %v722
      %v731 = vadd.f32 %v578, %v725
      %v732 = vadd.f32 %v234, %v728
      %v733 = vadd.f32 %v235, %v729
      %v734 = vadd.f32 %v236, %v730
      %v735 = vadd.f32 %v237, %v731
      %v736 = vld [vmem:[%s2] sm:$0x1]
      %v738 = vlaneseq
      %v739 = vshrl.u32 %v738, 7
      %v740 = vsub.s32 0, %v739
      %v741 = vrot.slane %v736, %v740
      %v743 = vadd.f32 %v732, %v741
      %v744 = vadd.f32 %v733, %v741
      %v745 = vadd.f32 %v734, %v741
      %v746 = vadd.f32 %v735, %v741
      %747 = vst [vmem:[%s231] sm:$0xff] %v743
      %748 = vst [vmem:[%s231 + $0x8] sm:$0xff] %v744
      %749 = vst [vmem:[%s231 + $0x10] sm:$0xff] %v745
      %750 = vst [vmem:[%s231 + $0x18] sm:$0xff] %v746
      %s751 = smul.u32 2, %s16
      %p752 = scmp.lt.s32.totalorder %s751, 3
      %s753 = scalar_select %p752, %s751, 3
      %s754 = smul.addr %s753, 2
      %s755 = smul.addr %s754, 8
      %s756 = scalar_lea.vmem %s5, %s755
      // Predicated region
      $region41: #{residual_block2.1} parent=39 // pred_check
        %p757 = pneg %p144
      $region42: #{residual_block2.1} parent=39 // pred_check_branch
        %759 = sbr.rel (%p757) target = $region44
      $region43: #{residual_block2.1} parent=39 // pred_region
        %s760 = smul.u32 2, %s16
      $region44: #{residual_block2.1} parent=39 // pred_fallthru
        _
    $region40: #{residual_block2.1} parent=5 // pred_fallthru
      _
    %p761 = scmp.le.s32.totalorder 2, %s11
    // Predicated region
    $region45: #{residual_block2.1} parent=5 // pred_check
      %p762 = pneg %p761
    $region46: #{residual_block2.1} parent=5 // pred_check_branch
      %764 = sbr.rel (%p762) target = $region48
    $region47: #{residual_block2.1} parent=5 // pred_region
      %s765 = ssub.s32 %s11, 2
      // Predicated region
      $region49: #{residual_block2.1} parent=47 // pred_check
        %p766 = pneg %p150
      $region50: #{residual_block2.1} parent=47 // pred_check_branch
        %768 = sbr.rel (%p766) target = $region52
      $region51: #{residual_block2.1} parent=47 // pred_region
        %s769 = smul.u32 2, %s17
        %p770 = scmp.lt.s32.totalorder %s769, 3
        %s771 = scalar_select %p770, %s769, 3
        %s772 = smul.addr %s771, 2
        %s773 = smul.addr %s772, 8
        %s774 = scalar_lea.vmem %s5, %s773
      $region52: #{residual_block2.1} parent=47 // pred_fallthru
        _
    $region48: #{residual_block2.1} parent=5 // pred_fallthru
      _
  $region6: #{residual_block2.1} parent=0 // loop_footer
    %s15 = sadd.s32 1, %s11
  $region7: #{residual_block2.1} parent=0 // loop_footer_branch
    %10 = sbr.rel target = $region3
  $region8: #{residual_block2.1} parent=0 // loop_exit
    _

</llo_original>
